<compile_context>
chip_gen: v7x
topology: tpu7x:2x2x1
jax: 0.10.0
libtpu: 0.0.40
codegen_flags: <defaults>
</compile_context>

<pallas_src>
import jax
import jax.numpy as jnp
from jax.experimental import pallas as pl
from jax.experimental.pallas import tpu as pltpu

LANE = 128      # vreg lane width
SUBLANE = 8     # vreg sublane count (f32)


def _round_up(n, m):
    return ((n + m - 1) // m) * m


def _pad_axis(a, axis, target):
    pad = target - a.shape[axis]
    if pad <= 0:
        return a
    widths = [(0, 0)] * a.ndim
    widths[axis] = (0, pad)
    return jnp.pad(a, widths)      # zero-pad so padded lanes stay inert


def dqn_kernel(x_ref, w1_ref, b1_ref, w2_ref, b2_ref, out_ref):
    # Cast x to the matmul dtype *inside* the kernel (no wrapper-side HBM
    # pass over the batch).  MXU handles K = F_in (e.g. 16) fine.
    x = x_ref[...].astype(w1_ref.dtype)
    # Hidden layer: MXU matmul (f32 accumulation), bias + ReLU in f32 (VPU).
    h = jnp.dot(x, w1_ref[...], preferred_element_type=jnp.float32)
    h = jnp.maximum(h + b1_ref[...], 0.0)
    h = h.astype(w2_ref.dtype)                       # no-op when f32
    # Output layer: MXU matmul + bias.  Store with the *unpadded* feature dim:
    # a masked store of O lanes beats a 128-lane padded writeback by 128/O.
    o = jnp.dot(h, w2_ref[...], preferred_element_type=jnp.float32)
    out_ref[...] = (o + b2_ref[...]).astype(out_ref.dtype)


def dqn_forward(x, w1, b1, w2, b2, *, matmul_dtype=None,
                batch_tile=4096, single_shot_max_batch=8192):
    """x: [B, in]; w1: [in, hidden]; b1: [hidden]; w2: [hidden, out];
    b2: [out].  Returns [B, out] in x.dtype.

    matmul_dtype=jnp.bfloat16 is recommended on v6e/v7x (bandwidth win,
    f32 accumulation kept); default keeps the module's f32 semantics."""
    B, F_in = x.shape
    H = w1.shape[1]
    O = w2.shape[1]

    md = jnp.dtype(matmul_dtype) if matmul_dtype is not None else x.dtype
    out_dtype = x.dtype

    # Pad only the (tiny, parameter-sized) hidden dim to 128 lanes so the
    # hidden activations are lane-dense.  Batch-sized tensors keep their
    # natural feature widths (no x pad/cast, no O->128 output padding).
    Hp = _round_up(H, LANE)
    w1_p = _pad_axis(w1, 1, Hp).astype(md)
    b1_p = _pad_axis(b1, 0, Hp).reshape(1, Hp).astype(jnp.float32)
    w2_p = _pad_axis(w2, 0, Hp).astype(md)
    b2_p = b2.reshape(1, O).astype(jnp.float32)

    if B <= single_shot_max_batch:
        # Single shot: whole problem resident in VMEM, no grid / pipeline
        # machinery (per-step pipeline overhead dominates at DQN sizes).
        vmem = pltpu.MemorySpace.VMEM
        return pl.pallas_call(
            dqn_kernel,
            out_shape=jax.ShapeDtypeStruct((B, O), out_dtype),
            in_specs=[pl.BlockSpec(memory_space=vmem)] * 5,
            out_specs=pl.BlockSpec(memory_space=vmem),
        )(x, w1_p, b1_p, w2_p, b2_p)

    # --- Tiled path for very large (replay-buffer) batches ------------------
    # Adaptive, even tile count (>=2) keeps batch padding bounded (<8 rows per
    # tile) and load-balances v7x's two TensorCores under "parallel".
    num_tiles = max(2, -(-B // batch_tile))
    if num_tiles % 2:
        num_tiles += 1
    TB = _round_up(-(-B // num_tiles), SUBLANE)
    Bp = TB * num_tiles
    x_p = _pad_axis(x, 0, Bp)          # pad batch rows only

    # Explicit VMEM budget from the actual buffers (v5e default scoped limit
    # is only 16 MiB; cap well under v7x's 64 MiB physical VMEM).
    x_bytes = jnp.dtype(x.dtype).itemsize
    md_bytes = jnp.dtype(md).itemsize
    out_bytes = jnp.dtype(out_dtype).itemsize
    est = (2 * TB * F_in * x_bytes                 # x tile, double-buffered
           + 2 * TB * O * out_bytes                # out tile, double-buffered
           + 2 * (F_in * Hp + Hp * O) * md_bytes   # resident weights
           + 2 * (Hp + O) * 4                      # resident biases
           + 2 * TB * Hp * 4 + TB * Hp * md_bytes)  # hidden temporaries
    vmem_limit = int(min(max(2 * est, 32 << 20), 48 << 20))

    # Weights/biases use constant index_maps -> fetched once, VMEM-resident
    # across the grid.  (Their spare pipeline buffer is only a few KiB at
    # these sizes, so pipeline_mode tuning is intentionally skipped.)
    out_p = pl.pallas_call(
        dqn_kernel,
        out_shape=jax.ShapeDtypeStruct((Bp, O), out_dtype),
        grid_spec=pltpu.PrefetchScalarGridSpec(
            num_scalar_prefetch=0,
            grid=(num_tiles,),
            in_specs=[
                pl.BlockSpec((TB, F_in), lambda i: (i, 0)),   # batch tile
                pl.BlockSpec((F_in, Hp), lambda i: (0, 0)),   # resident
                pl.BlockSpec((1, Hp), lambda i: (0, 0)),      # resident
                pl.BlockSpec((Hp, O), lambda i: (0, 0)),      # resident
                pl.BlockSpec((1, O), lambda i: (0, 0)),       # resident
            ],
            out_specs=pl.BlockSpec((TB, O), lambda i: (i, 0)),
        ),
        compiler_params=pltpu.CompilerParams(
            dimension_semantics=("parallel",),    # v7x: both TensorCores
            vmem_limit_bytes=vmem_limit),
    )(x_p, w1_p, b1_p, w2_p, b2_p)

    return out_p[:B]                   # drop padded batch rows only


def init_params(key, in_features, hidden_size, out_features):
    # Deterministic init mimicking nn.Linear's uniform(-1/sqrt(fan_in), +).
    k1, k2, k3, k4 = jax.random.split(key, 4)
    lim1 = 1.0 / jnp.sqrt(in_features)
    lim2 = 1.0 / jnp.sqrt(hidden_size)
    # Stored already transposed: [in, out].
    w1 = jax.random.uniform(k1, (in_features, hidden_size),
                            jnp.float32, -lim1, lim1)
    b1 = jax.random.uniform(k2, (hidden_size,), jnp.float32, -lim1, lim1)
    w2 = jax.random.uniform(k3, (hidden_size, out_features),
                            jnp.float32, -lim2, lim2)
    b2 = jax.random.uniform(k4, (out_features,), jnp.float32, -lim2, lim2)
    return w1, b1, w2, b2


def _ref_forward(x, w1, b1, w2, b2):
    return jnp.maximum(x @ w1 + b1, 0.0) @ w2 + b2


if __name__ == "__main__":
    key = jax.random.PRNGKey(0)
    kx, kp, kb = jax.random.split(key, 3)

    batch = 8
    in_features = 16
    hidden_size = 32
    out_features = 4

    x = jax.random.normal(kx, (batch, in_features), jnp.float32)
    w1, b1, w2, b2 = init_params(kp, in_features, hidden_size, out_features)
    ref = _ref_forward(x, w1, b1, w2, b2)

    # 1) Small batch, f32 matmuls: no-grid VMEM-resident path.
    out_f32 = jax.block_until_ready(dqn_forward(x, w1, b1, w2, b2))
    assert out_f32.shape == (batch, out_features)
    assert jnp.allclose(out_f32, ref, atol=1e-4, rtol=1e-4)

    # 2) Small batch, bf16 matmul operands (recommended on v6e/v7x;
    #    f32 accumulation / bias / ReLU).
    out_bf16 = jax.block_until_ready(
        dqn_forward(x, w1, b1, w2, b2, matmul_dtype=jnp.bfloat16))
    assert out_bf16.shape == (batch, out_features)
    assert jnp.allclose(out_bf16, ref, atol=3e-2, rtol=3e-2)

    # 3) Replay-buffer batch: per perf review this is ONE single-shot call
    #    (no grid) with unpadded x / unpadded output lanes.
    big_batch = 1024
    xb = jax.random.normal(kb, (big_batch, in_features), jnp.float32)
    refb = _ref_forward(xb, w1, b1, w2, b2)
    outb = jax.block_until_ready(dqn_forward(xb, w1, b1, w2, b2))
    assert outb.shape == (big_batch, out_features)
    assert jnp.allclose(outb, refb, atol=1e-4, rtol=1e-4)

    # 4) Coverage of the tiled/grid path: force it with a small threshold and
    #    a non-multiple batch so adaptive TB + batch padding + slice-off of
    #    padded rows are all exercised (weights resident, batch "parallel").
    outg = jax.block_until_ready(
        dqn_forward(xb[:1000], w1, b1, w2, b2, matmul_dtype=jnp.bfloat16,
                    batch_tile=256, single_shot_max_batch=128))
    assert outg.shape == (1000, out_features)
    assert jnp.allclose(outg, refb[:1000], atol=3e-2, rtol=3e-2)

    print("KERNEL_OK")
</pallas_src>

<mosaic_0001>
module attributes {stable_mosaic.version = 11 : i64} {
  func.func @dqn_kernel(%arg0: memref<8x16xf32, #tpu.memory_space<vmem>>, %arg1: memref<16x128xf32, #tpu.memory_space<vmem>>, %arg2: memref<1x128xf32, #tpu.memory_space<vmem>>, %arg3: memref<128x4xf32, #tpu.memory_space<vmem>>, %arg4: memref<1x4xf32, #tpu.memory_space<vmem>>, %arg5: memref<8x4xf32, #tpu.memory_space<vmem>>) attributes {dimension_semantics = [], scalar_prefetch = 0 : i64, scratch_operands = 0 : i64, tpu.core_type = #tpu.core_type<tc>} {
    %c0 = arith.constant 0 : index
    %c0_0 = arith.constant 0 : index
    %0 = vector.load %arg0[%c0, %c0_0] : memref<8x16xf32, #tpu.memory_space<vmem>>, vector<8x16xf32>
    %c0_1 = arith.constant 0 : index
    %c0_2 = arith.constant 0 : index
    %1 = vector.load %arg1[%c0_1, %c0_2] : memref<16x128xf32, #tpu.memory_space<vmem>>, vector<16x128xf32>
    %cst = arith.constant dense<0.000000e+00> : vector<8x128xf32>
    %2 = tpu.matmul %0, %1, %cst {dimension_numbers = #tpu.dot_dimension_numbers<[1], [0], [0], [1], [0, 0, 1, 1], [], []>} : vector<8x16xf32>, vector<16x128xf32>, vector<8x128xf32> -> vector<8x128xf32>
    %c0_3 = arith.constant 0 : index
    %c0_4 = arith.constant 0 : index
    %3 = vector.load %arg2[%c0_3, %c0_4] : memref<1x128xf32, #tpu.memory_space<vmem>>, vector<1x128xf32>
    %4 = vector.broadcast %3 : vector<1x128xf32> to vector<8x128xf32>
    %5 = arith.addf %2, %4 : vector<8x128xf32>
    %cst_5 = arith.constant 0.000000e+00 : f32
    %6 = vector.broadcast %cst_5 : f32 to vector<8x128xf32>
    %7 = arith.maximumf %5, %6 : vector<8x128xf32>
    %c0_6 = arith.constant 0 : index
    %c0_7 = arith.constant 0 : index
    %8 = vector.load %arg3[%c0_6, %c0_7] : memref<128x4xf32, #tpu.memory_space<vmem>>, vector<128x4xf32>
    %cst_8 = arith.constant dense<0.000000e+00> : vector<8x4xf32>
    %9 = tpu.matmul %7, %8, %cst_8 {dimension_numbers = #tpu.dot_dimension_numbers<[1], [0], [0], [1], [0, 0, 1, 1], [], []>} : vector<8x128xf32>, vector<128x4xf32>, vector<8x4xf32> -> vector<8x4xf32>
    %c0_9 = arith.constant 0 : index
    %c0_10 = arith.constant 0 : index
    %10 = vector.load %arg4[%c0_9, %c0_10] : memref<1x4xf32, #tpu.memory_space<vmem>>, vector<1x4xf32>
    %11 = vector.broadcast %10 : vector<1x4xf32> to vector<8x4xf32>
    %12 = arith.addf %9, %11 : vector<8x4xf32>
    %c0_11 = arith.constant 0 : index
    %c0_12 = arith.constant 0 : index
    %13 = vector.load %arg5[%c0_11, %c0_12] : memref<8x4xf32, #tpu.memory_space<vmem>>, vector<8x4xf32>
    tpu.vector_store %arg5[%c0_11, %c0_12], %12 {strides = array<i32>} : memref<8x4xf32, #tpu.memory_space<vmem>>, vector<8x4xf32>,
    return
  }
}

</mosaic_0001>

<llo_original>
// kernel: tpu_custom_call.1
$region0: #{tpu_custom_call.1}
  #allocation0 [shape = 'u32[]', space=smem, size = 0x4, offset = 0x4, fixed_abs, tag = 'smem constant byte address 0x4 - core index']
  #allocation1 [shape = 'u32[144,128]{1,0:T(1,128)}', space=vmem, size = 0x12000, scoped, tag = 'internal scratch']
  %s0 = inlined_call_operand.vmem [shape: f32[8,16], index: 0, kind: input, shape index: {}]
  %s1 = inlined_call_operand.vmem [shape: f32[16,128], index: 1, kind: input, shape index: {}]
  %s2 = inlined_call_operand.vmem [shape: f32[1,128], index: 2, kind: input, shape index: {}]
  %s3 = inlined_call_operand.vmem [shape: f32[128,4], index: 3, kind: input, shape index: {}]
  %s4 = inlined_call_operand.vmem [shape: f32[1,4], index: 4, kind: input, shape index: {}]
  %s5 = inlined_call_operand.vmem [shape: f32[8,4], index: 5, kind: output, shape index: {}]
  %s6 = sld [smem:[#allocation0]]
  $region30: #{tpu_custom_call.1} parent=0
    _
  %s8 = ssub.s32 1, %s6
  %s9 = scalar_select 0, %s8, %s6
  // Predicated region
  $region2: #{tpu_custom_call.1} parent=0 // pred_check
    _
  $region3: #{tpu_custom_call.1} parent=0 // pred_check_branch
    %11 = sbr.rel (0) target = $region5
  $region4: #{tpu_custom_call.1} parent=0 // pred_region
    _
  $region5: #{tpu_custom_call.1} parent=0 // pred_fallthru
    _
  // Predicated region
  $region6: #{tpu_custom_call.1} parent=0 // pred_check
    _
  $region7: #{tpu_custom_call.1} parent=0 // pred_check_branch
    %13 = sbr.rel (0) target = $region9
  $region8: #{tpu_custom_call.1} parent=0 // pred_region
    _
  $region9: #{tpu_custom_call.1} parent=0 // pred_fallthru
    _
  // Predicated region
  $region10: #{tpu_custom_call.1} parent=0 // pred_check
    _
  $region11: #{tpu_custom_call.1} parent=0 // pred_check_branch
    %15 = sbr.rel (0) target = $region13
  $region12: #{tpu_custom_call.1} parent=0 // pred_region
    _
  $region13: #{tpu_custom_call.1} parent=0 // pred_fallthru
    _
  // Predicated region
  $region14: #{tpu_custom_call.1} parent=0 // pred_check
    _
  $region15: #{tpu_custom_call.1} parent=0 // pred_check_branch
    %17 = sbr.rel (0) target = $region17
  $region16: #{tpu_custom_call.1} parent=0 // pred_region
    _
  $region17: #{tpu_custom_call.1} parent=0 // pred_fallthru
    _
  // Predicated region
  $region18: #{tpu_custom_call.1} parent=0 // pred_check
    _
  $region19: #{tpu_custom_call.1} parent=0 // pred_check_branch
    %19 = sbr.rel (0) target = $region21
  $region20: #{tpu_custom_call.1} parent=0 // pred_region
    _
  $region21: #{tpu_custom_call.1} parent=0 // pred_fallthru
    _
  %v20 = vld [vmem:[%s0] sm:$0xff]
  %v21 = vld [vmem:[%s1] sm:$0xff]
  %v22 = vld [vmem:[%s1 + $0x8] sm:$0xff]
  %v23 = vld [vmem:[%s2] sm:$0x1]
  %v25 = vlaneseq
  %v26 = vshrl.u32 %v25, 7
  %v27 = vsub.s32 0, %v26
  %v28 = vrot.slane %v23, %v27
  %vm30 = vcmask 130048
  %v32 = vsel %vm30, %v20, 0
  %34 = vmatprep.subr.mxu0 0.0
  %35 = vmatpush1.msra.mxu0 %v21
  %36 = vmatprep.subr.mxu0 0.0
  %37 = vmatpush1.msra.mxu0 %v22
  %38 = vmatprep.subr.mxu0 0.0
  %39 = vmatpush1.msra.mxu0 0.0
  %40 = vmatprep.subr.mxu0 0.0
  %41 = vmatpush1.msra.mxu0 0.0
  %42 = vmatprep.subr.mxu0 0.0
  %43 = vmatpush1.msra.mxu0 0.0
  %44 = vmatprep.subr.mxu0 0.0
  %45 = vmatpush1.msra.mxu0 0.0
  %46 = vmatprep.subr.mxu0 0.0
  %47 = vmatpush1.msra.mxu0 0.0
  %48 = vmatprep.subr.mxu0 0.0
  %49 = vmatpush1.msra.mxu0 0.0
  %50 = vmatprep.subr.mxu0 0.0
  %51 = vmatpush1.msra.mxu0 0.0
  %52 = vmatprep.subr.mxu0 0.0
  %53 = vmatpush1.msra.mxu0 0.0
  %54 = vmatprep.subr.mxu0 0.0
  %55 = vmatpush1.msra.mxu0 0.0
  %56 = vmatprep.subr.mxu0 0.0
  %57 = vmatpush1.msra.mxu0 0.0
  %58 = vmatprep.subr.mxu0 0.0
  %59 = vmatpush1.msra.mxu0 0.0
  %60 = vmatprep.subr.mxu0 0.0
  %61 = vmatpush1.msra.mxu0 0.0
  %62 = vmatprep.subr.mxu0 0.0
  %63 = vmatpush1.msra.mxu0 0.0
  %64 = vmatprep.subr.mxu0 0.0
  %65 = vmatpush1.msra.mxu0 0.0
  %66 = vmatprep.subr.mxu0 0.0
  %67 = vmatpush1.msra.mxu0 0.0
  %68 = vmatprep.subr.mxu0 0.0
  %69 = vmatpush1.msra.mxu0 0.0
  %70 = vmatprep.subr.mxu0 0.0
  %71 = vmatpush1.msra.mxu0 0.0
  %72 = vmatprep.subr.mxu0 0.0
  %73 = vmatpush1.msra.mxu0 0.0
  %74 = vmatprep.subr.mxu0 0.0
  %75 = vmatpush1.msra.mxu0 0.0
  %76 = vmatprep.subr.mxu0 0.0
  %77 = vmatpush1.msra.mxu0 0.0
  %78 = vmatprep.subr.mxu0 0.0
  %79 = vmatpush1.msra.mxu0 0.0
  %80 = vmatprep.subr.mxu0 0.0
  %81 = vmatpush1.msra.mxu0 0.0
  %82 = vmatprep.subr.mxu0 0.0
  %83 = vmatpush1.msra.mxu0 0.0
  %84 = vmatprep.subr.mxu0 0.0
  %85 = vmatpush1.msra.mxu0 0.0
  %86 = vmatprep.subr.mxu0 0.0
  %87 = vmatpush1.msra.mxu0 0.0
  %88 = vmatprep.subr.mxu0 0.0
  %89 = vmatpush1.msra.mxu0 0.0
  %90 = vmatprep.subr.mxu0 0.0
  %91 = vmatpush1.msra.mxu0 0.0
  %92 = vmatprep.subr.mxu0 0.0
  %93 = vmatpush1.msra.mxu0 0.0
  %94 = vmatprep.subr.mxu0 0.0
  %95 = vmatpush1.msra.mxu0 0.0
  %96 = vmatprep.subr.mxu0 0.0
  %97 = vmatpush1.msra.mxu0 0.0
  %98 = vmatprep.mubr.f32.mxu0 0.0
  %99 = vmatmul.mubr.f32.gmra.mrb[0].mxu0 %v32
  %v100 = vpop.f32.mrb[0].mxu0
  %v101 = vadd.f32 %v28, %v100
  %v102 = vpop.f32.mrb[0].mxu0
  %103 = vdwg.mxu0
  %v104 = vmax.f32 %v101, 0.0
  %v105 = vld [vmem:[%s3] sm:$0xff]
  %v106 = vld [vmem:[%s3 + $0x8] sm:$0xff]
  %v107 = vld [vmem:[%s3 + $0x10] sm:$0xff]
  %v108 = vld [vmem:[%s3 + $0x18] sm:$0xff]
  %v109 = vld [vmem:[%s3 + $0x20] sm:$0xff]
  %v110 = vld [vmem:[%s3 + $0x28] sm:$0xff]
  %v111 = vld [vmem:[%s3 + $0x30] sm:$0xff]
  %v112 = vld [vmem:[%s3 + $0x38] sm:$0xff]
  %v113 = vld [vmem:[%s3 + $0x40] sm:$0xff]
  %v114 = vld [vmem:[%s3 + $0x48] sm:$0xff]
  %v115 = vld [vmem:[%s3 + $0x50] sm:$0xff]
  %v116 = vld [vmem:[%s3 + $0x58] sm:$0xff]
  %v117 = vld [vmem:[%s3 + $0x60] sm:$0xff]
  %v118 = vld [vmem:[%s3 + $0x68] sm:$0xff]
  %v119 = vld [vmem:[%s3 + $0x70] sm:$0xff]
  %v120 = vld [vmem:[%s3 + $0x78] sm:$0xff]
  %v121 = vld [vmem:[%s4] sm:$0x1]
  %v123 = vlaneseq
  %v124 = vshrl.u32 %v123, 7
  %v125 = vsub.s32 0, %v124
  %v126 = vrot.slane %v121, %v125
  %128 = vmatprep.subr.mxu0 0.0
  %129 = vmatpush1.msra.mxu0 %v105
  %130 = vmatprep.subr.mxu0 0.0
  %131 = vmatpush1.msra.mxu0 %v106
  %132 = vmatprep.subr.mxu0 0.0
  %133 = vmatpush1.msra.mxu0 %v107
  %134 = vmatprep.subr.mxu0 0.0
  %135 = vmatpush1.msra.mxu0 %v108
  %136 = vmatprep.subr.mxu0 0.0
  %137 = vmatpush1.msra.mxu0 %v109
  %138 = vmatprep.subr.mxu0 0.0
  %139 = vmatpush1.msra.mxu0 %v110
  %140 = vmatprep.subr.mxu0 0.0
  %141 = vmatpush1.msra.mxu0 %v111
  %142 = vmatprep.subr.mxu0 0.0
  %143 = vmatpush1.msra.mxu0 %v112
  %144 = vmatprep.subr.mxu0 0.0
  %145 = vmatpush1.msra.mxu0 %v113
  %146 = vmatprep.subr.mxu0 0.0
  %147 = vmatpush1.msra.mxu0 %v114
  %148 = vmatprep.subr.mxu0 0.0
  %149 = vmatpush1.msra.mxu0 %v115
  %150 = vmatprep.subr.mxu0 0.0
  %151 = vmatpush1.msra.mxu0 %v116
  %152 = vmatprep.subr.mxu0 0.0
  %153 = vmatpush1.msra.mxu0 %v117
  %154 = vmatprep.subr.mxu0 0.0
  %155 = vmatpush1.msra.mxu0 %v118
  %156 = vmatprep.subr.mxu0 0.0
  %157 = vmatpush1.msra.mxu0 %v119
  %158 = vmatprep.subr.mxu0 0.0
  %159 = vmatpush1.msra.mxu0 %v120
  %160 = vmatprep.subr.mxu0 0.0
  %161 = vmatpush1.msra.mxu0 0.0
  %162 = vmatprep.subr.mxu0 0.0
  %163 = vmatpush1.msra.mxu0 0.0
  %164 = vmatprep.subr.mxu0 0.0
  %165 = vmatpush1.msra.mxu0 0.0
  %166 = vmatprep.subr.mxu0 0.0
  %167 = vmatpush1.msra.mxu0 0.0
  %168 = vmatprep.subr.mxu0 0.0
  %169 = vmatpush1.msra.mxu0 0.0
  %170 = vmatprep.subr.mxu0 0.0
  %171 = vmatpush1.msra.mxu0 0.0
  %172 = vmatprep.subr.mxu0 0.0
  %173 = vmatpush1.msra.mxu0 0.0
  %174 = vmatprep.subr.mxu0 0.0
  %175 = vmatpush1.msra.mxu0 0.0
  %176 = vmatprep.subr.mxu0 0.0
  %177 = vmatpush1.msra.mxu0 0.0
  %178 = vmatprep.subr.mxu0 0.0
  %179 = vmatpush1.msra.mxu0 0.0
  %180 = vmatprep.subr.mxu0 0.0
  %181 = vmatpush1.msra.mxu0 0.0
  %182 = vmatprep.subr.mxu0 0.0
  %183 = vmatpush1.msra.mxu0 0.0
  %184 = vmatprep.subr.mxu0 0.0
  %185 = vmatpush1.msra.mxu0 0.0
  %186 = vmatprep.subr.mxu0 0.0
  %187 = vmatpush1.msra.mxu0 0.0
  %188 = vmatprep.subr.mxu0 0.0
  %189 = vmatpush1.msra.mxu0 0.0
  %190 = vmatprep.subr.mxu0 0.0
  %191 = vmatpush1.msra.mxu0 0.0
  %192 = vmatprep.mubr.f32.mxu0 0.0
  %193 = vmatmul.mubr.f32.gmra.mrb[0].mxu0 %v104
  %v194 = vpop.f32.mrb[0].mxu0
  %v195 = vadd.f32 %v126, %v194
  %v196 = vpop.f32.mrb[0].mxu0
  %197 = vdwg.mxu0
  %vm198 = vcmask 31744
  %199 = vst.msk [vmem:[%s5] sm:$0xff] %vm198, %v195
  // Predicated region
  $region22: #{tpu_custom_call.1} parent=0 // pred_check
    _
  $region23: #{tpu_custom_call.1} parent=0 // pred_check_branch
    %201 = sbr.rel (0) target = $region25
  $region24: #{tpu_custom_call.1} parent=0 // pred_region
    _
  $region25: #{tpu_custom_call.1} parent=0 // pred_fallthru
    _
  // Predicated region
  $region26: #{tpu_custom_call.1} parent=0 // pred_check
    _
  $region27: #{tpu_custom_call.1} parent=0 // pred_check_branch
    %203 = sbr.rel (0) target = $region29
  $region28: #{tpu_custom_call.1} parent=0 // pred_region
    _
  $region29: #{tpu_custom_call.1} parent=0 // pred_fallthru
    _

</llo_original>
